<compile_context>
chip_gen: v5e
topology: v5e:2x2
jax: 0.10.0
libtpu: 0.0.40
codegen_flags: <defaults>
</compile_context>

<pallas_src>
import jax
import jax.numpy as jnp
from jax.experimental import pallas as pl
from jax.experimental.pallas import tpu as pltpu


# ----------------------------------------------------------------------------
# Kernel 1: negated pairwise squared distances
#   negD[n, p, q] = 2<a_p, a_q> - ||a_p||^2 - ||a_q||^2
# Tiled over the q axis so the output block is (1, P, tile_q).
# ----------------------------------------------------------------------------
def _neg_dist_kernel(pts_ref, d_ref):
    tq = d_ref.shape[2]
    P = pts_ref.shape[1]
    t = pl.program_id(1)
    base = t * tq
    if tq % 8 == 0:
        base = pl.multiple_of(base, 8)

    a = pts_ref[0].astype(jnp.float32)                              # (P, Cp)
    if tq == P:
        aq = a
    else:
        aq = pts_ref[0, pl.ds(base, tq), :].astype(jnp.float32)     # (tq, Cp)

    r_p = jnp.sum(a * a, axis=1, keepdims=True)                     # (P, 1)
    m = jax.lax.dot_general(a, aq, (((1,), (1,)), ((), ())),
                            preferred_element_type=jnp.float32)     # (P, tq)
    # ||a_q||^2 along lanes via a tiny ones-matmul (no in-kernel transpose).
    ones = jnp.ones(a.shape, jnp.float32)
    r_q = jax.lax.dot_general(ones, aq * aq, (((1,), (1,)), ((), ())),
                              preferred_element_type=jnp.float32)   # (P, tq)
    d_ref[0] = 2.0 * m - r_p - r_q


def pairwise_neg_sq_dists(points, tile_q=None):
    N, P, Cp = points.shape
    if tile_q is None:
        if P <= 512:
            tile_q = P
        else:
            tile_q = P
            for cand in (512, 256, 128):
                if P % cand == 0:
                    tile_q = cand
                    break
    assert P % tile_q == 0
    n_q = P // tile_q

    cost = pl.CostEstimate(
        flops=N * P * P * (4 * Cp + 4),
        transcendentals=0,
        bytes_accessed=N * P * Cp * 4 + N * P * P * 4,
    )
    return pl.pallas_call(
        _neg_dist_kernel,
        grid=(N, n_q),
        in_specs=[pl.BlockSpec((1, P, Cp), lambda n, t: (n, 0, 0))],
        out_specs=pl.BlockSpec((1, P, tile_q), lambda n, t: (n, 0, t)),
        out_shape=jax.ShapeDtypeStruct((N, P, P), jnp.float32),
        compiler_params=pltpu.CompilerParams(
            dimension_semantics=("parallel", "parallel")),
        cost_estimate=cost,
    )(points.astype(jnp.float32))


# ----------------------------------------------------------------------------
# Kernel 2: vectorized kNN gather (one-hot MXU matmul) + edge MLP (BN folded,
#           stacked (K*TP, c) matmuls) + neighbor pooling + shortcut + residual.
# ----------------------------------------------------------------------------
def _make_edgeconv_kernel(K, TP, num_layers, pooling, compute_dtype):
    cdt = compute_dtype

    def kernel(*refs):
        idx_ref, feat_ref, w1c_ref, w1b_ref = refs[0:4]
        wrest_refs = refs[4:3 + num_layers]
        wsc_ref, shifts_ref, out_ref = refs[3 + num_layers:6 + num_layers]

        t = pl.program_id(1)
        base = t * TP
        if TP % 8 == 0:
            base = pl.multiple_of(base, 8)

        P = feat_ref.shape[1]
        feat_all = feat_ref[0]                                   # (P, C) in cdt
        if TP == P:
            feat_tile = feat_all                                 # (TP, C)
        else:
            feat_tile = feat_ref[0, pl.ds(base, TP), :]

        # ---- vectorized kNN gather as a one-hot MXU matmul ------------------
        # idx block is pre-arranged k-major: row r = k*TP + p holds the global
        # neighbor index of (point base+p, neighbor k).
        idx_col = idx_ref[0]                                     # (K*TP, 1) int32
        q_iota = jax.lax.broadcasted_iota(jnp.int32, (K * TP, P), 1)
        oh = jnp.where(idx_col == q_iota,
                       jnp.array(1, cdt), jnp.array(0, cdt))     # (K*TP, P)
        knn = jnp.dot(oh, feat_all,
                      preferred_element_type=jnp.float32).astype(cdt)  # (K*TP, C)
        # TODO(synk): replace with a sublane dynamic-gather (jnp.take) once its
        # lowering is reliable; that would free this (otherwise idle) MXU pass.

        # ---- layer 1: concat([center, knn - center]) folded into split W1 ---
        c1 = w1b_ref.shape[1]
        sh1 = shifts_ref[0:1, 0:c1]                              # (1, c1) f32
        yc = jnp.dot(feat_tile, w1c_ref[...],
                     preferred_element_type=jnp.float32) + sh1   # (TP, c1)
        z = jnp.dot(knn, w1b_ref[...],
                    preferred_element_type=jnp.float32)          # (K*TP, c1)
        x = jnp.maximum(z + jnp.tile(yc, (K, 1)), 0.0)           # (K*TP, c1)

        # ---- remaining 1x1 convs: ONE stacked (K*TP, c) matmul per layer ----
        for li in range(1, num_layers):
            w_ref = wrest_refs[li - 1]
            width = w_ref.shape[1]
            sh = shifts_ref[li:li + 1, 0:width]
            x = jnp.maximum(
                jnp.dot(x.astype(cdt), w_ref[...],
                        preferred_element_type=jnp.float32) + sh, 0.0)

        # ---- neighbor pooling over the K stacked slabs (1/K pre-folded) -----
        acc = x[0:TP, :]
        if pooling == "average":
            for k in range(1, K):
                acc = acc + x[k * TP:(k + 1) * TP, :]
        else:  # 'max'
            for k in range(1, K):
                acc = jnp.maximum(acc, x[k * TP:(k + 1) * TP, :])

        # ---- shortcut 1x1 conv + folded BN + ReLU, residual add -------------
        csc = wsc_ref.shape[1]
        sh_sc = shifts_ref[num_layers:num_layers + 1, 0:csc]
        sc = jnp.maximum(
            jnp.dot(feat_tile, wsc_ref[...],
                    preferred_element_type=jnp.float32) + sh_sc, 0.0)   # (TP, csc)

        out_ref[0] = (acc + sc).astype(out_ref.dtype)            # lane-dense store

    return kernel


def _fold_params(params, c_in, compute_dtype, pooling, K, lane=128):
    """Fold eval-mode BN scale into conv weights, split W1 for the concat fold,
    fold 1/K (average pooling) into the last layer, and zero-pad the final
    output channels (last layer + shortcut) to a multiple of 128 lanes."""
    layers = params["layers"]
    wsc, ssc, bsc = params["shortcut"]
    channels = [w.shape[1] for (w, _, _) in layers]
    num_layers = len(layers)
    c_last = channels[-1]
    c_pad = ((c_last + lane - 1) // lane) * lane
    inv_k = (1.0 / K) if pooling == "average" else 1.0

    folded_w, folded_sh = [], []
    for i, (w, s, b) in enumerate(layers):
        wf = w * s                      # BN scale folded into the weights
        sh = b[0]
        if i == num_layers - 1:         # fold 1/K and lane-pad the output cols
            wf = jnp.pad(wf * inv_k, ((0, 0), (0, c_pad - c_last)))
            sh = jnp.pad(sh * inv_k, (0, c_pad - c_last))
        folded_w.append(wf)
        folded_sh.append(sh)

    # split layer 1: out = center @ (Wa - Wb) + knn @ Wb
    w0 = folded_w[0]
    w1c = (w0[:c_in] - w0[c_in:]).astype(compute_dtype)
    w1b = w0[c_in:].astype(compute_dtype)
    wrest = [w.astype(compute_dtype) for w in folded_w[1:]]

    wscf = jnp.pad(wsc * ssc, ((0, 0), (0, c_pad - c_last))).astype(compute_dtype)
    shsc = jnp.pad(bsc[0], (0, c_pad - c_last))

    sw = max([sh.shape[0] for sh in folded_sh] + [c_pad])
    shifts = jnp.zeros((num_layers + 1, sw), jnp.float32)
    for i, sh in enumerate(folded_sh):
        shifts = shifts.at[i, :sh.shape[0]].set(sh)
    shifts = shifts.at[num_layers, :c_pad].set(shsc)
    return w1c, w1b, wrest, wscf, shifts, channels, c_pad


def edge_conv_block(points, features, params, K, pooling="average",
                    compute_dtype=jnp.float32, tile_p=None):
    """points (N,P,Cp), features (N,P,C_in) -> (N,P,channels[-1])."""
    assert pooling in ("average", "max")
    N, P, C = features.shape

    # kNN selection: negated distances in Pallas, top-k in XLA.
    # TODO(synk): streaming in-kernel top-K (never materializing (N,P,P)) has no
    # clean Pallas equivalent yet; top_k stays as XLA glue.
    negD = pairwise_neg_sq_dists(points)
    _, idx = jax.lax.top_k(negD, K + 1)
    idx = idx[:, :, 1:]                                  # drop self (column 0)
    # TODO(synk): assumes the self index lands in column 0 (same assumption as
    # the pure-JAX reference); PyTorch tie-breaking may differ for duplicates.

    w1c, w1b, wrest, wscf, shifts, channels, c_pad = _fold_params(
        params, C, compute_dtype, pooling, K)
    c_last = channels[-1]
    num_layers = len(channels)

    # Tile P to bound per-step VMEM (v7x: 64 MiB physical / 32 MiB default scoped).
    if tile_p is None:
        if P <= 256:
            tile_p = P
        else:
            tile_p = 256 if P % 256 == 0 else (128 if P % 128 == 0 else P)
    assert P % tile_p == 0
    if tile_p != P:
        assert tile_p % 8 == 0
    TP = tile_p
    n_tiles = P // TP

    # Rearrange neighbor indices to k-major order within each P-tile:
    # idx_r[n, t*K*TP + k*TP + p, 0] = idx[n, t*TP + p, k]
    idx_r = idx.reshape(N, n_tiles, TP, K)
    idx_r = jnp.transpose(idx_r, (0, 1, 3, 2)).reshape(N, P * K, 1).astype(jnp.int32)

    feats_c = features.astype(compute_dtype)

    kernel = _make_edgeconv_kernel(K, TP, num_layers, pooling, compute_dtype)

    const2 = lambda n, t: (0, 0)
    in_specs = [
        pl.BlockSpec((1, K * TP, 1), lambda n, t: (n, t, 0)),     # neighbor idx
        pl.BlockSpec((1, P, C), lambda n, t: (n, 0, 0)),          # full features
        pl.BlockSpec(w1c.shape, const2),
        pl.BlockSpec(w1b.shape, const2),
        *[pl.BlockSpec(w.shape, const2) for w in wrest],
        pl.BlockSpec(wscf.shape, const2),
        pl.BlockSpec(shifts.shape, const2),
    ]
    out_spec = pl.BlockSpec((1, TP, c_pad), lambda n, t: (n, t, 0))

    flops_per_n = (2 * K * P * P * C                              # one-hot gather
                   + 2 * K * P * C * channels[0] + 2 * P * C * channels[0]
                   + sum(2 * K * P * channels[i - 1] * channels[i]
                         for i in range(1, num_layers))
                   + 2 * P * C * c_last)
    bytes_acc = (N * P * K * 4
                 + N * P * C * jnp.dtype(compute_dtype).itemsize
                 + N * P * c_pad * 4)
    cost = pl.CostEstimate(flops=N * flops_per_n, transcendentals=0,
                           bytes_accessed=int(bytes_acc))

    out = pl.pallas_call(
        kernel,
        grid=(N, n_tiles),
        in_specs=in_specs,
        out_specs=out_spec,
        out_shape=jax.ShapeDtypeStruct((N, P, c_pad), jnp.float32),
        compiler_params=pltpu.CompilerParams(
            dimension_semantics=("parallel", "parallel")),
        cost_estimate=cost,
    )(idx_r, feats_c, w1c, w1b, *wrest, wscf, shifts)

    return out[..., :c_last] if c_pad != c_last else out


# ----------------------------------------------------------------------------
# Deterministic synthetic parameter init (matches shapes of EdgeConvBlock.__init__)
# with_bn=True  => convs have no bias; BN(eval) expressed as (scale, shift).
# ----------------------------------------------------------------------------
def init_params(key, in_channels, channels, eps=1e-5):
    def bn_affine(kg, kb, km, kv, c):
        gamma = 1.0 + 0.1 * jax.random.normal(kg, (1, c), jnp.float32)
        beta = 0.1 * jax.random.normal(kb, (1, c), jnp.float32)
        mean = 0.1 * jax.random.normal(km, (1, c), jnp.float32)
        var = jax.nn.softplus(jax.random.normal(kv, (1, c), jnp.float32)) + 0.5
        scale = gamma / jnp.sqrt(var + eps)
        shift = beta - mean * scale
        return scale, shift

    layers = []
    in_ch = 2 * in_channels
    for out_ch in channels:
        key, kw, kg, kb, km, kv = jax.random.split(key, 6)
        w = 0.2 * jax.random.normal(kw, (in_ch, out_ch), jnp.float32)
        scale, shift = bn_affine(kg, kb, km, kv, out_ch)
        layers.append((w, scale, shift))
        in_ch = out_ch

    key, kw, kg, kb, km, kv = jax.random.split(key, 6)
    wsc = 0.2 * jax.random.normal(kw, (in_channels, channels[-1]), jnp.float32)
    ssc, bsc = bn_affine(kg, kb, km, kv, channels[-1])
    return {"layers": layers, "shortcut": (wsc, ssc, bsc)}


# ----------------------------------------------------------------------------
# Pure-JAX reference (mirrors the PyTorch forward) for validation.
# ----------------------------------------------------------------------------
def reference(points, features, params, K, pooling="average"):
    rA = jnp.sum(points * points, axis=2, keepdims=True)
    m = jnp.einsum("npc,nqc->npq", points, points)
    D = rA - 2.0 * m + jnp.swapaxes(rA, 1, 2)
    _, idx = jax.lax.top_k(-D, K + 1)
    idx = idx[:, :, 1:]
    knn = jax.vmap(lambda f, i: f[i])(features, idx)             # (N,P,K,C)
    center = jnp.broadcast_to(features[:, :, None, :], knn.shape)
    x = jnp.concatenate([center, knn - center], axis=-1)         # (N,P,K,2C)
    for (w, s, b) in params["layers"]:
        x = jnp.maximum(jnp.einsum("npkc,cd->npkd", x, w) * s + b, 0.0)
    pooled = jnp.mean(x, axis=2) if pooling == "average" else jnp.max(x, axis=2)
    wsc, ssc, bsc = params["shortcut"]
    sc = jnp.maximum(jnp.einsum("npc,cd->npd", features, wsc) * ssc + bsc, 0.0)
    return pooled + sc


if __name__ == "__main__":
    N, P, Cp, Cin, K = 2, 16, 3, 4, 8
    channels = [8, 16, 32]

    key = jax.random.PRNGKey(0)
    kpts, kfeat, kparam = jax.random.split(key, 3)
    points = jax.random.normal(kpts, (N, P, Cp), jnp.float32)
    features = jax.random.normal(kfeat, (N, P, Cin), jnp.float32)
    params = init_params(kparam, Cin, channels)

    # f32 path, average pooling
    out_avg = jax.block_until_ready(
        edge_conv_block(points, features, params, K, pooling="average"))
    ref_avg = reference(points, features, params, K, pooling="average")
    assert out_avg.shape == (N, P, channels[-1]), out_avg.shape
    assert jnp.allclose(out_avg, ref_avg, atol=1e-4, rtol=1e-4), \
        float(jnp.max(jnp.abs(out_avg - ref_avg)))

    # f32 path, max pooling
    out_max = jax.block_until_ready(
        edge_conv_block(points, features, params, K, pooling="max"))
    ref_max = reference(points, features, params, K, pooling="max")
    assert jnp.allclose(out_max, ref_max, atol=1e-4, rtol=1e-4), \
        float(jnp.max(jnp.abs(out_max - ref_max)))

    # bf16 MXU operands (f32 accumulation) -- looser tolerance.
    out_bf16 = jax.block_until_ready(
        edge_conv_block(points, features, params, K, pooling="average",
                        compute_dtype=jnp.bfloat16))
    assert jnp.allclose(out_bf16, ref_avg, atol=5e-2, rtol=5e-2), \
        float(jnp.max(jnp.abs(out_bf16 - ref_avg)))

    print("KERNEL_OK")
</pallas_src>

<mosaic_0001>
module attributes {stable_mosaic.version = 11 : i64} {
  func.func @_neg_dist_kernel(%arg0: i32, %arg1: i32, %arg2: memref<1x16x3xf32, #tpu.memory_space<vmem>>, %arg3: memref<1x16x16xf32, #tpu.memory_space<vmem>>) attributes {dimension_semantics = [#tpu.dimension_semantics<parallel>, #tpu.dimension_semantics<parallel>], iteration_bounds = array<i64: 2, 1>, scalar_prefetch = 0 : i64, scratch_operands = 0 : i64, tpu.core_type = #tpu.core_type<tc>, window_params = [{transform_indices = @transform_0, window_bounds = array<i64: 1, 16, 3>}, {transform_indices = @transform_1, window_bounds = array<i64: 1, 16, 16>}]} {
    %c0 = arith.constant 0 : index
    %c0_0 = arith.constant 0 : index
    %c0_1 = arith.constant 0 : index
    %0 = vector.load %arg2[%c0, %c0_0, %c0_1] : memref<1x16x3xf32, #tpu.memory_space<vmem>>, vector<1x16x3xf32>
    %1 = vector.shape_cast %0 : vector<1x16x3xf32> to vector<16x3xf32>
    %2 = arith.mulf %1, %1 : vector<16x3xf32>
    %cst = arith.constant dense<0.000000e+00> : vector<16xf32>
    %3 = vector.multi_reduction <add>, %2, %cst [1] : vector<16x3xf32> to vector<16xf32>
    %4 = vector.shape_cast %3 : vector<16xf32> to vector<16x1xf32>
    %cst_2 = arith.constant dense<0.000000e+00> : vector<16x16xf32>
    %5 = tpu.matmul %1, %1, %cst_2 {dimension_numbers = #tpu.dot_dimension_numbers<[1], [1], [0], [0], [0, 0, 1, 0], [], []>} : vector<16x3xf32>, vector<16x3xf32>, vector<16x16xf32> -> vector<16x16xf32>
    %cst_3 = arith.constant 1.000000e+00 : f32
    %6 = vector.broadcast %cst_3 : f32 to vector<16x3xf32>
    %7 = arith.mulf %1, %1 : vector<16x3xf32>
    %cst_4 = arith.constant dense<0.000000e+00> : vector<16x16xf32>
    %8 = tpu.matmul %6, %7, %cst_4 {dimension_numbers = #tpu.dot_dimension_numbers<[1], [1], [0], [0], [0, 0, 1, 0], [], []>} : vector<16x3xf32>, vector<16x3xf32>, vector<16x16xf32> -> vector<16x16xf32>
    %cst_5 = arith.constant 2.000000e+00 : f32
    %9 = vector.broadcast %cst_5 : f32 to vector<16x16xf32>
    %10 = arith.mulf %9, %5 : vector<16x16xf32>
    %11 = vector.broadcast %4 : vector<16x1xf32> to vector<16x16xf32>
    %12 = arith.subf %10, %11 : vector<16x16xf32>
    %13 = arith.subf %12, %8 : vector<16x16xf32>
    %c0_6 = arith.constant 0 : index
    %c0_7 = arith.constant 0 : index
    %c0_8 = arith.constant 0 : index
    %14 = vector.load %arg3[%c0_6, %c0_7, %c0_8] : memref<1x16x16xf32, #tpu.memory_space<vmem>>, vector<1x16x16xf32>
    %15 = vector.shape_cast %14 : vector<1x16x16xf32> to vector<16x16xf32>
    %16 = vector.shape_cast %13 : vector<16x16xf32> to vector<1x16x16xf32>
    tpu.vector_store %arg3[%c0_6, %c0_7, %c0_8], %16 {strides = array<i32>} : memref<1x16x16xf32, #tpu.memory_space<vmem>>, vector<1x16x16xf32>,
    return
  }
  func.func @transform_0(%arg0: i32, %arg1: i32) -> (i32, i32, i32) {
    %c0_i32 = arith.constant 0 : i32
    %c0_i32_0 = arith.constant 0 : i32
    %c0_i32_1 = arith.constant 0 : i32
    return %arg0, %c0_i32, %c0_i32_0 : i32, i32, i32
  }
  func.func @transform_1(%arg0: i32, %arg1: i32) -> (i32, i32, i32) {
    %c0_i32 = arith.constant 0 : i32
    %c0_i32_0 = arith.constant 0 : i32
    return %arg0, %c0_i32, %arg1 : i32, i32, i32
  }
}

</mosaic_0001>

<llo_original>
// kernel: tpu_custom_call.1
$region0: #{tpu_custom_call.1}
  #allocation0 [shape = 'u32[]', space=smem, size = 0x4, offset = 0x4, fixed_abs, tag = 'smem constant byte address 0x4 - core index']
  #allocation1 [shape = 'u32[72,128]{1,0:T(1,128)}', space=vmem, size = 0x9000, scoped, tag = 'internal scratch']
  %s0 = inlined_call_operand.vmem [shape: f32[2,16,3], index: 0, kind: input, shape index: {}]
  %s1 = inlined_call_operand.hbm [shape: f32[2,16,16], index: 1, kind: output, shape index: {}]
  %s2 = sld [smem:[#allocation0]]
  $region37: #{tpu_custom_call.1} parent=0
    _
  %s4 = ssub.s32 1, %s2
  %s5 = scalar_select 0, %s4, %s2
  $region1: #{tpu_custom_call.1} parent=0
    #allocation2 [shape = 'u8[16384]{0}', space=vmem, size = 0x4000, scoped, tag = 'output window, operand 0']
    #allocation3 [shape = 's32[2]{0}', space=sflag, size = 0x8, scoped, tag = 'scoped memory for tpu_custom_call.1']
    %6 = vsyncpa [#allocation3], 0
    %s7 = scalar_lea.sflag [#allocation3], 1
    %8 = vsyncpa %s7, 0
    loop: start=0, step=1, limit=4
    $region2: #{tpu_custom_call.1} parent=1 // loop_pre_header
      _
    $region3: #{tpu_custom_call.1} parent=1 // loop_header
      %s10 = sphi 0, %s14
      %p11 = scmp.ge.s32.totalorder %s10, 4
      %s17 = sphi 0, %s29
      %s18 = sphi 0, %s25
      %s19 = sphi 0, %s17
      %s20 = sphi 0, %s18
      %s21 = sphi 0, %s19
      %s22 = sphi 0, %s20
      %s32 = sphi 0, %s34
      %s35 = sphi 0, %s32
      %s36 = sphi 0, %s35
      %s52 = sphi 0, %s36
      %s60 = sphi 0, %s62
      %s63 = sphi 0, %s60
      %s64 = sphi 0, %s63
      %s80 = sphi 0, %s64
    $region4: #{tpu_custom_call.1} parent=1 // loop_header_branch
      %13 = sbr.rel (%p11) target = $region8
    $region5: #{tpu_custom_call.1} parent=1 // loop_body
      %s15 = ssub.s32 %s10, 1
      %s16 = ssub.s32 %s10, 2
      %s23 = sadd.s32 1, %s18
      %p24 = scmp.ge.s32.totalorder %s23, 1
      %s25 = scalar_select %p24, 0, %s23
      %s26 = sadd.s32 1, %s17
      %s27 = scalar_select %p24, %s26, %s17
      %p28 = scmp.ge.s32.totalorder %s27, 2
      %s29 = scalar_select %p28, 0, %s27
      %s30 = ssub.s32 %s17, %s29
      %p31 = scmp.eq.s32.totalorder %s30, 0
      %s33 = sadd.s32 %s32, 1
      %s34 = scalar_select %p31, %s32, %s33
      %p37 = pneg %p31
      %p38 = scmp.eq.s32.totalorder %s10, 1
      %p39 = por %p37, %p38
      %p40 = scmp.ne.s32.totalorder %s32, %s35
      %p41 = scmp.eq.s32.totalorder %s10, 0
      %p42 = por %p40, %p41
      %p43 = scmp.ne.s32.totalorder %s32, %s35
      %p44 = scmp.eq.s32.totalorder %s15, 1
      %p45 = por %p43, %p44
      %p46 = scmp.ne.s32.totalorder %s35, %s36
      %p47 = scmp.eq.s32.totalorder %s15, 0
      %p48 = por %p46, %p47
      %p49 = scmp.ne.s32.totalorder %s35, %s36
      %p50 = scmp.eq.s32.totalorder %s16, 1
      %p51 = por %p49, %p50
      %p53 = scmp.ne.s32.totalorder %s36, %s52
      %p54 = scmp.eq.s32.totalorder %s16, 0
      %p55 = por %p53, %p54
      %s56 = ssub.s32 %s17, %s29
      %s57 = ssub.s32 %s18, %s25
      %s58 = sor.u32 %s56, %s57
      %p59 = scmp.eq.s32.totalorder %s58, 0
      %s61 = sadd.s32 %s60, 1
      %s62 = scalar_select %p59, %s60, %s61
      %p65 = pneg %p59
      %p66 = scmp.eq.s32.totalorder %s10, 1
      %p67 = por %p65, %p66
      %p68 = scmp.ne.s32.totalorder %s60, %s63
      %p69 = scmp.eq.s32.totalorder %s10, 0
      %p70 = por %p68, %p69
      %p71 = scmp.ne.s32.totalorder %s60, %s63
      %p72 = scmp.eq.s32.totalorder %s15, 1
      %p73 = por %p71, %p72
      %p74 = scmp.ne.s32.totalorder %s63, %s64
      %p75 = scmp.eq.s32.totalorder %s15, 0
      %p76 = por %p74, %p75
      %p77 = scmp.ne.s32.totalorder %s63, %s64
      %p78 = scmp.eq.s32.totalorder %s16, 1
      %p79 = por %p77, %p78
      %p81 = scmp.ne.s32.totalorder %s64, %s80
      %p82 = scmp.eq.s32.totalorder %s16, 0
      %p83 = por %p81, %p82
      %p84 = scmp.le.s32.totalorder 1, %s10
      %p85 = scmp.lt.s32.totalorder %s10, 3
      %p86 = pnand %p84, %p85
      %p87 = pneg %p86
      // Predicated region
      $region9: #{tpu_custom_call.1} parent=5 // pred_check
        _
      $region10: #{tpu_custom_call.1} parent=5 // pred_check_branch
        %89 = sbr.rel (%p86) target = $region12
      $region11: #{tpu_custom_call.1} parent=5 // pred_region
        %s90 = ssub.s32 %s10, 1
      $region12: #{tpu_custom_call.1} parent=5 // pred_fallthru
        _
      %p91 = scmp.lt.s32.totalorder %s10, 2
      // Predicated region
      $region13: #{tpu_custom_call.1} parent=5 // pred_check
        %p92 = pneg %p91
      $region14: #{tpu_custom_call.1} parent=5 // pred_check_branch
        %94 = sbr.rel (%p92) target = $region16
      $region15: #{tpu_custom_call.1} parent=5 // pred_region
        // Predicated region
        $region17: #{tpu_custom_call.1} parent=15 // pred_check
          %p95 = pneg %p42
        $region18: #{tpu_custom_call.1} parent=15 // pred_check_branch
          %97 = sbr.rel (%p95) target = $region20
        $region19: #{tpu_custom_call.1} parent=15 // pred_region
          %p98 = scmp.lt.s32.totalorder %s17, 1
          %s99 = scalar_select %p98, %s17, 1
          %s100 = smul.addr %s99, 2
          %s101 = smul.addr %s100, 8
          %s102 = scalar_lea.vmem %s0, %s101
        $region20: #{tpu_custom_call.1} parent=15 // pred_fallthru
          _
      $region16: #{tpu_custom_call.1} parent=5 // pred_fallthru
        _
      %p103 = scmp.le.s32.totalorder 1, %s10
      %p104 = scmp.lt.s32.totalorder %s10, 3
      %p105 = pnand %p103, %p104
      %p106 = pneg %p105
      // Predicated region
      $region21: #{tpu_custom_call.1} parent=5 // pred_check
        _
      $region22: #{tpu_custom_call.1} parent=5 // pred_check_branch
        %108 = sbr.rel (%p105) target = $region24
      $region23: #{tpu_custom_call.1} parent=5 // pred_region
        %s109 = ssub.s32 %s10, 1
        %p110 = scmp.lt.s32.totalorder %s19, 1
        %s111 = scalar_select %p110, %s19, 1
        %s112 = smul.addr %s111, 2
        %s113 = smul.addr %s112, 8
        %s114 = scalar_lea.vmem %s0, %s113
        %p115 = pneg %p48
        %p116 = pneg %p45
        %p117 = pneg %p76
        %p118 = pneg %p73
        %s119 = sand.u32 %s63, 1
        %s120 = scalar_lea.sflag [#allocation3], %s119
        %s121 = sand.u32 %s63, 1
        %s122 = smul.addr %s121, 16
        %s123 = scalar_lea.vmem [#allocation2], %s122
        %p124 = scmp.lt.s32.totalorder %s19, 1
        %s125 = scalar_select %p124, %s19, 1
        %s126 = smul.addr %s125, 2
        %s127 = smul.addr %s126, 8
        %s128 = scalar_lea.vmem %s0, %s127
        %v129 = vld [vmem:[%s128] sm:$0xff]
        %v130 = vld [vmem:[%s128 + $0x8] sm:$0xff]
        %v131 = vmul.f32 %v129, %v129
        %v132 = vmul.f32 %v130, %v130
        %vm133 = vcmask 23552
        %v134 = vsel %vm133, %v131, 0.0
        %135 = vadd.xlane.f32.xlu0 %v134
        %v136 = vpop.xlane.xlu0 %135
        %v137 = vsel %vm133, %v132, 0.0
        %138 = vadd.xlane.f32.xlu0 %v137
        %v139 = vpop.xlane.xlu0 %138
        %v141 = vsel %vm133, %v129, 0
        %v144 = vsel %vm133, %v130, 0
        %146 = vmatpush.xpose.msra.mxu0 0.0
        %147 = vmatpush.xpose.msra.mxu0 0.0
        %148 = vmatpush.xpose.msra.mxu0 0.0
        %149 = vmatpush.xpose.msra.mxu0 0.0
        %150 = vmatpush.xpose.msra.mxu0 0.0
        %151 = vmatpush.xpose.msra.mxu0 0.0
        %152 = vmatpush.xpose.msra.mxu0 0.0
        %153 = vmatpush.xpose.msra.mxu0 0.0
        %154 = vmatpush.xpose.msra.mxu0 0.0
        %155 = vmatpush.xpose.msra.mxu0 0.0
        %156 = vmatpush.xpose.msra.mxu0 0.0
        %157 = vmatpush.xpose.msra.mxu0 0.0
        %158 = vmatpush.xpose.msra.mxu0 0.0
        %159 = vmatpush.xpose.msra.mxu0 0.0
        %160 = vmatpush.xpose.msra.mxu0 %v144
        %161 = vmatpush.xpose.msra.mxu0 %v141
        %162 = vmatmul.f32.gmra.mxu0 %v141
        %v163 = vpop.f32.mrf.mxu0
        %v164 = vadd.f32 0.0, %v163
        %165 = vmatmul.f32.gmra.mxu0 %v144
        %v166 = vpop.f32.mrf.mxu0
        %v167 = vadd.f32 0.0, %v166
        %168 = vdwg.mxu0
        %v170 = vsel %vm133, 1.0, 0
        %v173 = vsel %vm133, %v131, 0
        %v176 = vsel %vm133, %v132, 0
        %178 = vmatpush.xpose.msra.mxu0 0.0
        %179 = vmatpush.xpose.msra.mxu0 0.0
        %180 = vmatpush.xpose.msra.mxu0 0.0
        %181 = vmatpush.xpose.msra.mxu0 0.0
        %182 = vmatpush.xpose.msra.mxu0 0.0
        %183 = vmatpush.xpose.msra.mxu0 0.0
        %184 = vmatpush.xpose.msra.mxu0 0.0
        %185 = vmatpush.xpose.msra.mxu0 0.0
        %186 = vmatpush.xpose.msra.mxu0 0.0
        %187 = vmatpush.xpose.msra.mxu0 0.0
        %188 = vmatpush.xpose.msra.mxu0 0.0
        %189 = vmatpush.xpose.msra.mxu0 0.0
        %190 = vmatpush.xpose.msra.mxu0 0.0
        %191 = vmatpush.xpose.msra.mxu0 0.0
        %192 = vmatpush.xpose.msra.mxu0 %v176
        %193 = vmatpush.xpose.msra.mxu0 %v173
        %194 = vmatmul.f32.gmra.mxu0 %v170
        %v195 = vpop.f32.mrf.mxu0
        %v196 = vadd.f32 0.0, %v195
        %197 = vmatmul.f32.gmra.mxu0 %v170
        %v198 = vpop.f32.mrf.mxu0
        %v199 = vadd.f32 0.0, %v198
        %200 = vdwg.mxu0
        %v201 = vmul.f32 %v164, 2.0
        %v202 = vmul.f32 %v167, 2.0
        %v203 = vsub.f32 %v201, %v136
        %v204 = vsub.f32 %v202, %v139
        %v205 = vsub.f32 %v203, %v196
        %v206 = vsub.f32 %v204, %v199
        %vm207 = vcmask 130048
        %208 = vst.msk [vmem:[%s123] sm:$0xff] %vm207, %v205
        %209 = vst.msk [vmem:[%s123 + $0x8] sm:$0xff] %vm207, %v206
        %s210 = sand.u32 %s63, 1
        %s211 = scalar_lea.sflag [#allocation3], %s210
        %s212 = sand.u32 %s63, 1
        %s213 = smul.addr %s212, 16
        %s214 = scalar_lea.vmem [#allocation2], %s213
        // Predicated region
        $region25: #{tpu_custom_call.1} parent=23 // pred_check
          %p215 = pneg %p73
        $region26: #{tpu_custom_call.1} parent=23 // pred_check_branch
          %217 = sbr.rel (%p215) target = $region28
        $region27: #{tpu_custom_call.1} parent=23 // pred_region
          %219 = vsyncadd %s211, 0
          %s220 = smul.addr %s19, 2
          %s221 = sadd.s32 %s20, %s220
          %s222 = smul.addr %s221, 8
          %s223 = scalar_lea.hbm %s1, %s222
          %s224 = sshll.u32 %s214, 4
          %s225 = int_to_ptr.vmem [resolvable:$true] %s224
          %s226 = sshll.u32 %s223, 4
          %s227 = int_to_ptr.hbm [resolvable:$true] %s226
          %232 = dma.vmem_to_hbm [thread:$0]  %s225, 256, %s227, %s211, 128, 128, 8
        $region28: #{tpu_custom_call.1} parent=23 // pred_fallthru
          _
      $region24: #{tpu_custom_call.1} parent=5 // pred_fallthru
        _
      %p233 = scmp.le.s32.totalorder 2, %s10
      // Predicated region
      $region29: #{tpu_custom_call.1} parent=5 // pred_check
        %p234 = pneg %p233
      $region30: #{tpu_custom_call.1} parent=5 // pred_check_branch
        %236 = sbr.rel (%p234) target = $region32
      $region31: #{tpu_custom_call.1} parent=5 // pred_region
        %s237 = ssub.s32 %s10, 2
        // Predicated region
        $region33: #{tpu_custom_call.1} parent=31 // pred_check
          %p238 = pneg %p79
        $region34: #{tpu_custom_call.1} parent=31 // pred_check_branch
          %240 = sbr.rel (%p238) target = $region36
        $region35: #{tpu_custom_call.1} parent=31 // pred_region
          %s241 = sand.u32 %s64, 1
          %s242 = scalar_lea.sflag [#allocation3], %s241
          %s243 = sand.u32 %s64, 1
          %s244 = smul.addr %s243, 16
          %s245 = scalar_lea.vmem [#allocation2], %s244
          %247 = dma.done %s242, 256
        $region36: #{tpu_custom_call.1} parent=31 // pred_fallthru
          _
      $region32: #{tpu_custom_call.1} parent=5 // pred_fallthru
        _
    $region6: #{tpu_custom_call.1} parent=1 // loop_footer
      %s14 = sadd.s32 1, %s10
    $region7: #{tpu_custom_call.1} parent=1 // loop_footer_branch
      %9 = sbr.rel target = $region3
    $region8: #{tpu_custom_call.1} parent=1 // loop_exit
      _
    %248 = vsyncpa [#allocation3], 1
    %s249 = scalar_lea.sflag [#allocation3], 1
    %250 = vsyncpa %s249, 1

</llo_original>
